<compile_context>
chip_gen: v5e
topology: v5e:2x2
jax: 0.10.0
libtpu: 0.0.40
codegen_flags: <defaults>
</compile_context>

<pallas_src>
import functools

import jax
import jax.numpy as jnp
from jax import lax
from jax.experimental import pallas as pl
from jax.experimental.pallas import tpu as pltpu


def _sdpa_kernel(q_ref, k_ref, v_ref, out_ref, attn_ref, log_attn_ref, *,
                 inv_temperature):
    # Blocks: q (BB, TQ, D), k (BB, Lk, D), v (BB, Lk, Dv)
    # Fold 1/temperature into Q (fewer VALU ops than dividing the (TQ, Lk) scores).
    q = q_ref[...].astype(jnp.float32) * inv_temperature
    k = k_ref[...]
    v = v_ref[...]

    # QK^T without an explicit transpose: contract last dims, batch over dim 0 (MXU).
    s = lax.dot_general(
        q.astype(k.dtype), k,
        dimension_numbers=(((2,), (2,)), ((0,), (0,))),
        preferred_element_type=jnp.float32)                       # (BB, TQ, Lk)

    # Numerically stable softmax / log_softmax over the last axis (torch dim=2).
    m = jnp.max(s, axis=-1, keepdims=True)
    shifted = s - m
    e = jnp.exp(shifted)                                          # EUP
    denom = jnp.sum(e, axis=-1, keepdims=True)                    # XLU reduce
    log_denom = jnp.log(denom)                                    # EUP (exact, for log_softmax)
    inv_denom = pl.reciprocal(denom, approx=True)                 # EUP slot, ~free
    attn = e * inv_denom
    log_attn = shifted - log_denom

    # output = attn @ v (MXU), batched over dim 0.
    out = lax.dot_general(
        attn.astype(v.dtype), v,
        dimension_numbers=(((2,), (1,)), ((0,), (0,))),
        preferred_element_type=jnp.float32)                       # (BB, TQ, Dv)

    out_ref[...] = out.astype(out_ref.dtype)
    attn_ref[...] = attn.astype(attn_ref.dtype)
    log_attn_ref[...] = log_attn.astype(log_attn_ref.dtype)


def _choose_tiles(B, Lq, Lk, D, Dv, itemsize, vmem_budget_bytes=24 * 1024 * 1024):
    """Pick (BB, TQ): batch-block and query-tile sizes that fit a VMEM budget.

    Budget models double-buffered inputs + outputs per grid step, and is chosen
    to stay under the 32 MiB default scoped VMEM limit (and well under v7x's
    64 MiB physical VMEM).
    """

    def step_bytes(bb, tq):
        per_block = bb * (tq * D + Lk * D + Lk * Dv + tq * Dv + 2 * tq * Lk)
        return 2 * per_block * itemsize  # x2 for double-buffering

    # TQ must divide Lq and be a multiple of 8 (or equal the full Lq extent).
    tq_candidates = [Lq] + [t for t in (2048, 1024, 512, 256, 128, 64, 32, 16, 8)
                            if t < Lq and Lq % t == 0]
    tq = tq_candidates[-1]
    for cand in tq_candidates:          # largest first
        if step_bytes(1, cand) <= vmem_budget_bytes:
            tq = cand
            break

    # Pack as many batch elements per step as still fit (amortizes per-step
    # overhead and fills sublanes/MXU for small shapes).
    bb = 1
    for cand in range(B, 0, -1):
        if B % cand == 0 and step_bytes(cand, tq) <= vmem_budget_bytes:
            bb = cand
            break
    return bb, tq, step_bytes(bb, tq)


def scaled_dot_product_attention(q, k, v, temperature):
    B, Lq, D = q.shape
    _, Lk, _ = k.shape
    _, _, Dv = v.shape

    itemsize = max(jnp.dtype(q.dtype).itemsize, 4)  # f32 accumulation inside the kernel
    BB, TQ, step_bytes = _choose_tiles(B, Lq, Lk, D, Dv, itemsize)

    kernel = functools.partial(_sdpa_kernel,
                               inv_temperature=1.0 / float(temperature))

    grid = (B // BB, Lq // TQ)

    grid_spec = pltpu.PrefetchScalarGridSpec(
        num_scalar_prefetch=0,
        grid=grid,
        in_specs=[
            pl.BlockSpec((BB, TQ, D), lambda b, i: (b, i, 0)),
            pl.BlockSpec((BB, Lk, D), lambda b, i: (b, 0, 0)),
            pl.BlockSpec((BB, Lk, Dv), lambda b, i: (b, 0, 0)),
        ],
        out_specs=[
            pl.BlockSpec((BB, TQ, Dv), lambda b, i: (b, i, 0)),
            pl.BlockSpec((BB, TQ, Lk), lambda b, i: (b, i, 0)),
            pl.BlockSpec((BB, TQ, Lk), lambda b, i: (b, i, 0)),
        ],
    )

    out_shapes = (
        jax.ShapeDtypeStruct((B, Lq, Dv), q.dtype),
        jax.ShapeDtypeStruct((B, Lq, Lk), q.dtype),
        jax.ShapeDtypeStruct((B, Lq, Lk), q.dtype),
    )

    # Explicit scoped-VMEM limit: enough headroom over the modeled per-step
    # footprint, kept below v7x's 64 MiB physical VMEM.
    vmem_limit = min(max(step_bytes + (8 << 20), 32 << 20), 60 << 20)

    return pl.pallas_call(
        kernel,
        out_shape=out_shapes,
        grid_spec=grid_spec,
        compiler_params=pltpu.CompilerParams(
            dimension_semantics=("parallel", "parallel"),
            vmem_limit_bytes=vmem_limit,
        ),
    )(q, k, v)


def _reference(q, k, v, temperature):
    attn_logits = jnp.einsum("bqd,bkd->bqk", q, k) / temperature
    attn = jax.nn.softmax(attn_logits, axis=2)
    log_attn = jax.nn.log_softmax(attn_logits, axis=2)
    out = jnp.einsum("bqk,bkd->bqd", attn, v)
    return out, attn, log_attn


if __name__ == "__main__":
    # Small shapes consistent with the module's bmm-based forward.
    B, Lq, Lk, D, Dv = 2, 8, 8, 32, 32
    temperature = float(jnp.sqrt(jnp.float32(D)))  # typical choice: sqrt(d_k)

    key = jax.random.PRNGKey(0)
    kq, kk, kv = jax.random.split(key, 3)
    q = jax.random.normal(kq, (B, Lq, D), dtype=jnp.float32)
    k = jax.random.normal(kk, (B, Lk, D), dtype=jnp.float32)
    v = jax.random.normal(kv, (B, Lk, Dv), dtype=jnp.float32)

    out, attn, log_attn = scaled_dot_product_attention(q, k, v, temperature)
    jax.block_until_ready((out, attn, log_attn))

    # Sanity check against plain-JAX reference. Tolerance accounts for the
    # approximate EUP reciprocal used in the softmax normalization (~1e-4 rel).
    ref_out, ref_attn, ref_log_attn = _reference(q, k, v, temperature)
    assert jnp.allclose(out, ref_out, atol=2e-3, rtol=2e-3)
    assert jnp.allclose(attn, ref_attn, atol=2e-3, rtol=2e-3)
    assert jnp.allclose(log_attn, ref_log_attn, atol=2e-3, rtol=2e-3)

    print("KERNEL_OK")
</pallas_src>

<mosaic_0001>
module attributes {stable_mosaic.version = 11 : i64} {
  func.func @_sdpa_kernel(%arg0: i32, %arg1: i32, %arg2: memref<2x8x32xf32, #tpu.memory_space<vmem>>, %arg3: memref<2x8x32xf32, #tpu.memory_space<vmem>>, %arg4: memref<2x8x32xf32, #tpu.memory_space<vmem>>, %arg5: memref<2x8x32xf32, #tpu.memory_space<vmem>>, %arg6: memref<2x8x8xf32, #tpu.memory_space<vmem>>, %arg7: memref<2x8x8xf32, #tpu.memory_space<vmem>>) attributes {dimension_semantics = [#tpu.dimension_semantics<parallel>, #tpu.dimension_semantics<parallel>], iteration_bounds = array<i64: 1, 1>, scalar_prefetch = 0 : i64, scratch_operands = 0 : i64, tpu.core_type = #tpu.core_type<tc>, window_params = [{transform_indices = @transform_0, window_bounds = array<i64: 2, 8, 32>}, {transform_indices = @transform_1, window_bounds = array<i64: 2, 8, 32>}, {transform_indices = @transform_2, window_bounds = array<i64: 2, 8, 32>}, {transform_indices = @transform_3, window_bounds = array<i64: 2, 8, 32>}, {transform_indices = @transform_4, window_bounds = array<i64: 2, 8, 8>}, {transform_indices = @transform_5, window_bounds = array<i64: 2, 8, 8>}]} {
    %c0 = arith.constant 0 : index
    %c0_0 = arith.constant 0 : index
    %c0_1 = arith.constant 0 : index
    %0 = vector.load %arg2[%c0, %c0_0, %c0_1] : memref<2x8x32xf32, #tpu.memory_space<vmem>>, vector<2x8x32xf32>
    %cst = arith.constant 0.176776692 : f32
    %1 = vector.broadcast %cst : f32 to vector<2x8x32xf32>
    %2 = arith.mulf %0, %1 : vector<2x8x32xf32>
    %c0_2 = arith.constant 0 : index
    %c0_3 = arith.constant 0 : index
    %c0_4 = arith.constant 0 : index
    %3 = vector.load %arg3[%c0_2, %c0_3, %c0_4] : memref<2x8x32xf32, #tpu.memory_space<vmem>>, vector<2x8x32xf32>
    %c0_5 = arith.constant 0 : index
    %c0_6 = arith.constant 0 : index
    %c0_7 = arith.constant 0 : index
    %4 = vector.load %arg4[%c0_5, %c0_6, %c0_7] : memref<2x8x32xf32, #tpu.memory_space<vmem>>, vector<2x8x32xf32>
    %cst_8 = arith.constant dense<0.000000e+00> : vector<2x8x8xf32>
    %5 = tpu.matmul %2, %3, %cst_8 {dimension_numbers = #tpu.dot_dimension_numbers<[2], [2], [1], [1], [0, 0, 0, 1, 1, 1], [0], [0]>} : vector<2x8x32xf32>, vector<2x8x32xf32>, vector<2x8x8xf32> -> vector<2x8x8xf32>
    %cst_9 = arith.constant dense<0xFF800000> : vector<2x8xf32>
    %6 = vector.multi_reduction <maximumf>, %5, %cst_9 [2] : vector<2x8x8xf32> to vector<2x8xf32>
    %7 = vector.shape_cast %6 : vector<2x8xf32> to vector<2x8x1xf32>
    %8 = vector.broadcast %7 : vector<2x8x1xf32> to vector<2x8x8xf32>
    %9 = arith.subf %5, %8 : vector<2x8x8xf32>
    %10 = math.exp %9 : vector<2x8x8xf32>
    %cst_10 = arith.constant dense<0.000000e+00> : vector<2x8xf32>
    %11 = vector.multi_reduction <add>, %10, %cst_10 [2] : vector<2x8x8xf32> to vector<2x8xf32>
    %12 = vector.shape_cast %11 : vector<2x8xf32> to vector<2x8x1xf32>
    %13 = math.log %12 : vector<2x8x1xf32>
    %14 = tpu.reciprocal %12 {approx = true} : vector<2x8x1xf32> -> vector<2x8x1xf32>
    %15 = vector.broadcast %14 : vector<2x8x1xf32> to vector<2x8x8xf32>
    %16 = arith.mulf %10, %15 : vector<2x8x8xf32>
    %17 = vector.broadcast %13 : vector<2x8x1xf32> to vector<2x8x8xf32>
    %18 = arith.subf %9, %17 : vector<2x8x8xf32>
    %cst_11 = arith.constant dense<0.000000e+00> : vector<2x8x32xf32>
    %19 = tpu.matmul %16, %4, %cst_11 {dimension_numbers = #tpu.dot_dimension_numbers<[2], [1], [1], [2], [0, 0, 0, 1, 1, 2], [0], [0]>} : vector<2x8x8xf32>, vector<2x8x32xf32>, vector<2x8x32xf32> -> vector<2x8x32xf32>
    %c0_12 = arith.constant 0 : index
    %c0_13 = arith.constant 0 : index
    %c0_14 = arith.constant 0 : index
    %20 = vector.load %arg5[%c0_12, %c0_13, %c0_14] : memref<2x8x32xf32, #tpu.memory_space<vmem>>, vector<2x8x32xf32>
    tpu.vector_store %arg5[%c0_12, %c0_13, %c0_14], %19 {strides = array<i32>} : memref<2x8x32xf32, #tpu.memory_space<vmem>>, vector<2x8x32xf32>,
    %c0_15 = arith.constant 0 : index
    %c0_16 = arith.constant 0 : index
    %c0_17 = arith.constant 0 : index
    %21 = vector.load %arg6[%c0_15, %c0_16, %c0_17] : memref<2x8x8xf32, #tpu.memory_space<vmem>>, vector<2x8x8xf32>
    tpu.vector_store %arg6[%c0_15, %c0_16, %c0_17], %16 {strides = array<i32>} : memref<2x8x8xf32, #tpu.memory_space<vmem>>, vector<2x8x8xf32>,
    %c0_18 = arith.constant 0 : index
    %c0_19 = arith.constant 0 : index
    %c0_20 = arith.constant 0 : index
    %22 = vector.load %arg7[%c0_18, %c0_19, %c0_20] : memref<2x8x8xf32, #tpu.memory_space<vmem>>, vector<2x8x8xf32>
    tpu.vector_store %arg7[%c0_18, %c0_19, %c0_20], %18 {strides = array<i32>} : memref<2x8x8xf32, #tpu.memory_space<vmem>>, vector<2x8x8xf32>,
    return
  }
  func.func @transform_0(%arg0: i32, %arg1: i32) -> (i32, i32, i32) {
    %c0_i32 = arith.constant 0 : i32
    %c0_i32_0 = arith.constant 0 : i32
    return %arg0, %arg1, %c0_i32 : i32, i32, i32
  }
  func.func @transform_1(%arg0: i32, %arg1: i32) -> (i32, i32, i32) {
    %c0_i32 = arith.constant 0 : i32
    %c0_i32_0 = arith.constant 0 : i32
    %c0_i32_1 = arith.constant 0 : i32
    return %arg0, %c0_i32, %c0_i32_0 : i32, i32, i32
  }
  func.func @transform_2(%arg0: i32, %arg1: i32) -> (i32, i32, i32) {
    %c0_i32 = arith.constant 0 : i32
    %c0_i32_0 = arith.constant 0 : i32
    %c0_i32_1 = arith.constant 0 : i32
    return %arg0, %c0_i32, %c0_i32_0 : i32, i32, i32
  }
  func.func @transform_3(%arg0: i32, %arg1: i32) -> (i32, i32, i32) {
    %c0_i32 = arith.constant 0 : i32
    %c0_i32_0 = arith.constant 0 : i32
    return %arg0, %arg1, %c0_i32 : i32, i32, i32
  }
  func.func @transform_4(%arg0: i32, %arg1: i32) -> (i32, i32, i32) {
    %c0_i32 = arith.constant 0 : i32
    %c0_i32_0 = arith.constant 0 : i32
    return %arg0, %arg1, %c0_i32 : i32, i32, i32
  }
  func.func @transform_5(%arg0: i32, %arg1: i32) -> (i32, i32, i32) {
    %c0_i32 = arith.constant 0 : i32
    %c0_i32_0 = arith.constant 0 : i32
    return %arg0, %arg1, %c0_i32 : i32, i32, i32
  }
}

</mosaic_0001>

<llo_original>
// kernel: tpu_custom_call.1
$region0: #{tpu_custom_call.1}
  #allocation0 [shape = 'u32[]', space=smem, size = 0x4, offset = 0x4, fixed_abs, tag = 'smem constant byte address 0x4 - core index']
  #allocation1 [shape = 'u32[72,128]{1,0:T(1,128)}', space=vmem, size = 0x9000, scoped, tag = 'internal scratch']
  %s0 = inlined_call_operand.hbm [shape: f32[2,8,32], index: 0, kind: input, shape index: {}]
  %s1 = inlined_call_operand.hbm [shape: f32[2,8,32], index: 1, kind: input, shape index: {}]
  %s2 = inlined_call_operand.hbm [shape: f32[2,8,32], index: 2, kind: input, shape index: {}]
  %s3 = inlined_call_operand.hbm [shape: f32[2,8,32], index: 3, kind: output, shape index: {0}]
  %s4 = inlined_call_operand.hbm [shape: f32[2,8,8], index: 4, kind: output, shape index: {1}]
  %s5 = inlined_call_operand.hbm [shape: f32[2,8,8], index: 5, kind: output, shape index: {2}]
  %6 = xla_tuple %s3, %s4, %s5
  %s7 = sld [smem:[#allocation0]]
  $region50: #{tpu_custom_call.1} parent=0
    _
  %s9 = ssub.s32 1, %s7
  %s10 = scalar_select 0, %s9, %s7
  $region1: #{tpu_custom_call.1} parent=0
    #allocation2 [shape = 'u8[8192]{0}', space=vmem, size = 0x2000, scoped, tag = 'input window, operand 0, single buffered']
    #allocation3 [shape = 's32[1]{0}', space=sflag, size = 0x4, scoped, tag = 'scoped memory for tpu_custom_call.1']
    #allocation4 [shape = 's32[1]{0}', space=sflag, size = 0x4, scoped, tag = 'scoped memory for tpu_custom_call.1']
    #allocation5 [shape = 'u8[8192]{0}', space=vmem, size = 0x2000, scoped, tag = 'input window, operand 1, single buffered']
    #allocation6 [shape = 's32[1]{0}', space=sflag, size = 0x4, scoped, tag = 'scoped memory for tpu_custom_call.1']
    #allocation7 [shape = 'u8[8192]{0}', space=vmem, size = 0x2000, scoped, tag = 'input window, operand 2, single buffered']
    #allocation8 [shape = 'u8[8192]{0}', space=vmem, size = 0x2000, scoped, tag = 'output window, operand 0, single buffered']
    #allocation9 [shape = 'u8[8192]{0}', space=vmem, size = 0x2000, scoped, tag = 'output window, operand 1, single buffered']
    #allocation10 [shape = 's32[1]{0}', space=sflag, size = 0x4, scoped, tag = 'scoped memory for tpu_custom_call.1']
    #allocation11 [shape = 'u8[8192]{0}', space=vmem, size = 0x2000, scoped, tag = 'output window, operand 2, single buffered']
    %11 = vsyncpa [#allocation3], 0
    %12 = vsyncpa [#allocation6], 0
    %13 = vsyncpa [#allocation4], 0
    %14 = vsyncpa [#allocation10], 0
    // Predicated region
    $region2: #{tpu_custom_call.1} parent=1 // pred_check
      _
    $region3: #{tpu_custom_call.1} parent=1 // pred_check_branch
      %16 = sbr.rel (0) target = $region5
    $region4: #{tpu_custom_call.1} parent=1 // pred_region
      %18 = vsyncadd [#allocation3], 0
      %s19 = sshll.u32 %s0, 4
      %s20 = int_to_ptr.hbm [resolvable:$true] %s19
      %s21 = sshll.u32 [#allocation2], 4
      %s22 = int_to_ptr.vmem [resolvable:$true] %s21
      %27 = dma.hbm_to_vmem [thread:$0]  %s20, 256, %s22, [#allocation3], 128, 128, 8
    $region5: #{tpu_custom_call.1} parent=1 // pred_fallthru
      _
    // Predicated region
    $region6: #{tpu_custom_call.1} parent=1 // pred_check
      _
    $region7: #{tpu_custom_call.1} parent=1 // pred_check_branch
      %29 = sbr.rel (0) target = $region9
    $region8: #{tpu_custom_call.1} parent=1 // pred_region
      %31 = vsyncadd [#allocation6], 0
      %s32 = sshll.u32 %s1, 4
      %s33 = int_to_ptr.hbm [resolvable:$true] %s32
      %s34 = sshll.u32 [#allocation5], 4
      %s35 = int_to_ptr.vmem [resolvable:$true] %s34
      %40 = dma.hbm_to_vmem [thread:$0]  %s33, 256, %s35, [#allocation6], 128, 128, 8
    $region9: #{tpu_custom_call.1} parent=1 // pred_fallthru
      _
    // Predicated region
    $region10: #{tpu_custom_call.1} parent=1 // pred_check
      _
    $region11: #{tpu_custom_call.1} parent=1 // pred_check_branch
      %42 = sbr.rel (0) target = $region13
    $region12: #{tpu_custom_call.1} parent=1 // pred_region
      %44 = vsyncadd [#allocation6], 0
      %s45 = sshll.u32 %s2, 4
      %s46 = int_to_ptr.hbm [resolvable:$true] %s45
      %s47 = sshll.u32 [#allocation7], 4
      %s48 = int_to_ptr.vmem [resolvable:$true] %s47
      %53 = dma.hbm_to_vmem [thread:$0]  %s46, 256, %s48, [#allocation6], 128, 128, 8
    $region13: #{tpu_custom_call.1} parent=1 // pred_fallthru
      _
    // Predicated region
    $region14: #{tpu_custom_call.1} parent=1 // pred_check
      _
    $region15: #{tpu_custom_call.1} parent=1 // pred_check_branch
      %55 = sbr.rel (0) target = $region17
    $region16: #{tpu_custom_call.1} parent=1 // pred_region
      %57 = dma.done [#allocation3], 256
    $region17: #{tpu_custom_call.1} parent=1 // pred_fallthru
      _
    // Predicated region
    $region18: #{tpu_custom_call.1} parent=1 // pred_check
      _
    $region19: #{tpu_custom_call.1} parent=1 // pred_check_branch
      %59 = sbr.rel (0) target = $region21
    $region20: #{tpu_custom_call.1} parent=1 // pred_region
      %61 = dma.done [#allocation6], 256
    $region21: #{tpu_custom_call.1} parent=1 // pred_fallthru
      _
    // Predicated region
    $region22: #{tpu_custom_call.1} parent=1 // pred_check
      _
    $region23: #{tpu_custom_call.1} parent=1 // pred_check_branch
      %63 = sbr.rel (0) target = $region25
    $region24: #{tpu_custom_call.1} parent=1 // pred_region
      %65 = dma.done [#allocation6], 256
    $region25: #{tpu_custom_call.1} parent=1 // pred_fallthru
      _
    %v66 = vld [vmem:[#allocation2] sm:$0xff]
    %v67 = vld [vmem:[#allocation2 + $0x8] sm:$0xff]
    %v68 = vmul.f32 %v66, 0.17677669
    %v69 = vmul.f32 %v67, 0.17677669
    %v70 = vld [vmem:[#allocation5] sm:$0xff]
    %v71 = vld [vmem:[#allocation5 + $0x8] sm:$0xff]
    %v72 = vld [vmem:[#allocation7] sm:$0xff]
    %v73 = vld [vmem:[#allocation7 + $0x8] sm:$0xff]
    %vm74 = vcmask 261120
    %v76 = vsel %vm74, %v68, 0
    %v79 = vsel %vm74, %v70, 0
    %81 = vmatpush.xpose.msra.mxu0 0.0
    %82 = vmatpush.xpose.msra.mxu0 0.0
    %83 = vmatpush.xpose.msra.mxu0 0.0
    %84 = vmatpush.xpose.msra.mxu0 0.0
    %85 = vmatpush.xpose.msra.mxu0 0.0
    %86 = vmatpush.xpose.msra.mxu0 0.0
    %87 = vmatpush.xpose.msra.mxu0 0.0
    %88 = vmatpush.xpose.msra.mxu0 0.0
    %89 = vmatpush.xpose.msra.mxu0 0.0
    %90 = vmatpush.xpose.msra.mxu0 0.0
    %91 = vmatpush.xpose.msra.mxu0 0.0
    %92 = vmatpush.xpose.msra.mxu0 0.0
    %93 = vmatpush.xpose.msra.mxu0 0.0
    %94 = vmatpush.xpose.msra.mxu0 0.0
    %95 = vmatpush.xpose.msra.mxu0 0.0
    %96 = vmatpush.xpose.msra.mxu0 %v79
    %97 = vmatmul.f32.gmra.mxu0 %v76
    %v98 = vpop.f32.mrf.mxu0
    %v99 = vadd.f32 0.0, %v98
    %100 = vdwg.mxu0
    %v102 = vsel %vm74, %v69, 0
    %v105 = vsel %vm74, %v71, 0
    %107 = vmatpush.xpose.msra.mxu0 0.0
    %108 = vmatpush.xpose.msra.mxu0 0.0
    %109 = vmatpush.xpose.msra.mxu0 0.0
    %110 = vmatpush.xpose.msra.mxu0 0.0
    %111 = vmatpush.xpose.msra.mxu0 0.0
    %112 = vmatpush.xpose.msra.mxu0 0.0
    %113 = vmatpush.xpose.msra.mxu0 0.0
    %114 = vmatpush.xpose.msra.mxu0 0.0
    %115 = vmatpush.xpose.msra.mxu0 0.0
    %116 = vmatpush.xpose.msra.mxu0 0.0
    %117 = vmatpush.xpose.msra.mxu0 0.0
    %118 = vmatpush.xpose.msra.mxu0 0.0
    %119 = vmatpush.xpose.msra.mxu0 0.0
    %120 = vmatpush.xpose.msra.mxu0 0.0
    %121 = vmatpush.xpose.msra.mxu0 0.0
    %122 = vmatpush.xpose.msra.mxu0 %v105
    %123 = vmatmul.f32.gmra.mxu0 %v102
    %v124 = vpop.f32.mrf.mxu0
    %v125 = vadd.f32 0.0, %v124
    %126 = vdwg.mxu0
    %vm127 = vcmask 64512
    %v128 = vsel %vm127, %v99, -inf
    %129 = vmax.xlane.f32.xlu0 %v128
    %v130 = vpop.xlane.xlu0 %129
    %v131 = vsel %vm127, %v125, -inf
    %132 = vmax.xlane.f32.xlu0 %v131
    %v133 = vpop.xlane.xlu0 %132
    %v134 = vsub.f32 %v99, %v130
    %v135 = vsub.f32 %v125, %v133
    %v136 = vmul.f32 %v134, 1.442695
    %v137 = vpow.pop %v136
    %v138 = vmul.f32 %v135, 1.442695
    %v139 = vpow.pop %v138
    %v140 = vsel %vm127, %v137, 0.0
    %141 = vadd.xlane.f32.xlu0 %v140
    %v142 = vpop.xlane.xlu0 %141
    %v143 = vsel %vm127, %v139, 0.0
    %144 = vadd.xlane.f32.xlu0 %v143
    %v145 = vpop.xlane.xlu0 %144
    %v146 = vlog2.pop %v142
    %v147 = vmul.f32 %v146, 0.6931472
    %v148 = vlog2.pop %v145
    %v149 = vmul.f32 %v148, 0.6931472
    %v150 = vrcp.pop %v142
    %v151 = vrcp.pop %v145
    %v152 = vmul.f32 %v137, %v150
    %v153 = vmul.f32 %v139, %v151
    %v154 = vsub.f32 %v134, %v147
    %v155 = vsub.f32 %v135, %v149
    %v157 = vsel %vm127, %v152, 0
    %159 = vmatpush.msra.mxu0 0.0
    %160 = vmatpush.msra.mxu0 0.0
    %161 = vmatpush.msra.mxu0 0.0
    %162 = vmatpush.msra.mxu0 0.0
    %163 = vmatpush.msra.mxu0 0.0
    %164 = vmatpush.msra.mxu0 0.0
    %165 = vmatpush.msra.mxu0 0.0
    %166 = vmatpush.msra.mxu0 0.0
    %167 = vmatpush.msra.mxu0 0.0
    %168 = vmatpush.msra.mxu0 0.0
    %169 = vmatpush.msra.mxu0 0.0
    %170 = vmatpush.msra.mxu0 0.0
    %171 = vmatpush.msra.mxu0 0.0
    %172 = vmatpush.msra.mxu0 0.0
    %173 = vmatpush.msra.mxu0 0.0
    %174 = vmatpush.msra.mxu0 %v72
    %175 = vmatmul.f32.gmra.mxu0 %v157
    %v176 = vpop.f32.mrf.mxu0
    %v177 = vadd.f32 0.0, %v176
    %178 = vdwg.mxu0
    %v180 = vsel %vm127, %v153, 0
    %182 = vmatpush.msra.mxu0 0.0
    %183 = vmatpush.msra.mxu0 0.0
    %184 = vmatpush.msra.mxu0 0.0
    %185 = vmatpush.msra.mxu0 0.0
    %186 = vmatpush.msra.mxu0 0.0
    %187 = vmatpush.msra.mxu0 0.0
    %188 = vmatpush.msra.mxu0 0.0
    %189 = vmatpush.msra.mxu0 0.0
    %190 = vmatpush.msra.mxu0 0.0
    %191 = vmatpush.msra.mxu0 0.0
    %192 = vmatpush.msra.mxu0 0.0
    %193 = vmatpush.msra.mxu0 0.0
    %194 = vmatpush.msra.mxu0 0.0
    %195 = vmatpush.msra.mxu0 0.0
    %196 = vmatpush.msra.mxu0 0.0
    %197 = vmatpush.msra.mxu0 %v73
    %198 = vmatmul.f32.gmra.mxu0 %v180
    %v199 = vpop.f32.mrf.mxu0
    %v200 = vadd.f32 0.0, %v199
    %201 = vdwg.mxu0
    %202 = vst.msk [vmem:[#allocation8] sm:$0xff] %vm74, %v177
    %203 = vst.msk [vmem:[#allocation8 + $0x8] sm:$0xff] %vm74, %v200
    %204 = vst.msk [vmem:[#allocation9] sm:$0xff] %vm127, %v152
    %205 = vst.msk [vmem:[#allocation9 + $0x8] sm:$0xff] %vm127, %v153
    %206 = vst.msk [vmem:[#allocation11] sm:$0xff] %vm127, %v154
    %207 = vst.msk [vmem:[#allocation11 + $0x8] sm:$0xff] %vm127, %v155
    // Predicated region
    $region26: #{tpu_custom_call.1} parent=1 // pred_check
      _
    $region27: #{tpu_custom_call.1} parent=1 // pred_check_branch
      %209 = sbr.rel (0) target = $region29
    $region28: #{tpu_custom_call.1} parent=1 // pred_region
      %211 = vsyncadd [#allocation4], 0
      %s212 = sshll.u32 [#allocation8], 4
      %s213 = int_to_ptr.vmem [resolvable:$true] %s212
      %s214 = sshll.u32 %s3, 4
      %s215 = int_to_ptr.hbm [resolvable:$true] %s214
      %220 = dma.vmem_to_hbm [thread:$0]  %s213, 256, %s215, [#allocation4], 128, 128, 8
    $region29: #{tpu_custom_call.1} parent=1 // pred_fallthru
      _
    // Predicated region
    $region30: #{tpu_custom_call.1} parent=1 // pred_check
      _
    $region31: #{tpu_custom_call.1} parent=1 // pred_check_branch
      %222 = sbr.rel (0) target = $region33
    $region32: #{tpu_custom_call.1} parent=1 // pred_region
      %224 = vsyncadd [#allocation10], 0
      %s225 = sshll.u32 [#allocation9], 4
      %s226 = int_to_ptr.vmem [resolvable:$true] %s225
      %s227 = sshll.u32 %s4, 4
      %s228 = int_to_ptr.hbm [resolvable:$true] %s227
      %233 = dma.vmem_to_hbm [thread:$0]  %s226, 256, %s228, [#allocation10], 128, 128, 8
    $region33: #{tpu_custom_call.1} parent=1 // pred_fallthru
      _
    // Predicated region
    $region34: #{tpu_custom_call.1} parent=1 // pred_check
      _
    $region35: #{tpu_custom_call.1} parent=1 // pred_check_branch
      %235 = sbr.rel (0) target = $region37
    $region36: #{tpu_custom_call.1} parent=1 // pred_region
      %237 = vsyncadd [#allocation10], 0
      %s238 = sshll.u32 [#allocation11], 4
      %s239 = int_to_ptr.vmem [resolvable:$true] %s238
      %s240 = sshll.u32 %s5, 4
      %s241 = int_to_ptr.hbm [resolvable:$true] %s240
      %246 = dma.vmem_to_hbm [thread:$0]  %s239, 256, %s241, [#allocation10], 128, 128, 8
    $region37: #{tpu_custom_call.1} parent=1 // pred_fallthru
      _
    // Predicated region
    $region38: #{tpu_custom_call.1} parent=1 // pred_check
      _
    $region39: #{tpu_custom_call.1} parent=1 // pred_check_branch
      %248 = sbr.rel (0) target = $region41
    $region40: #{tpu_custom_call.1} parent=1 // pred_region
      %250 = dma.done [#allocation4], 256
    $region41: #{tpu_custom_call.1} parent=1 // pred_fallthru
      _
    // Predicated region
    $region42: #{tpu_custom_call.1} parent=1 // pred_check
      _
    $region43: #{tpu_custom_call.1} parent=1 // pred_check_branch
      %252 = sbr.rel (0) target = $region45
    $region44: #{tpu_custom_call.1} parent=1 // pred_region
      %254 = dma.done [#allocation10], 256
    $region45: #{tpu_custom_call.1} parent=1 // pred_fallthru
      _
    // Predicated region
    $region46: #{tpu_custom_call.1} parent=1 // pred_check
      _
    $region47: #{tpu_custom_call.1} parent=1 // pred_check_branch
      %256 = sbr.rel (0) target = $region49
    $region48: #{tpu_custom_call.1} parent=1 // pred_region
      %258 = dma.done [#allocation10], 256
    $region49: #{tpu_custom_call.1} parent=1 // pred_fallthru
      _
    %259 = vsyncpa [#allocation3], 1
    %260 = vsyncpa [#allocation6], 1
    %261 = vsyncpa [#allocation4], 1
    %262 = vsyncpa [#allocation10], 1

</llo_original>
